<compile_context>
chip_gen: v7x
topology: tpu7x:2x2x1
jax: 0.10.0
libtpu: 0.0.40
codegen_flags: <defaults>
</compile_context>

<pallas_src>
import jax
import jax.numpy as jnp
from jax import lax
from jax.experimental import pallas as pl
from jax.experimental.pallas import tpu as pltpu


def _round_up(x, m):
    return ((x + m - 1) // m) * m


def _patch_embed_kernel(x_ref, w_ref, b_ref, o_ref):
    # x_ref : (tm, K)  tile of flattened patches (rows are independent)
    # w_ref : (K, E)   resident projection weight (conv weight reshaped)
    # b_ref : (1, E)   resident bias
    # o_ref : (tm, E)  output tile
    acc = jnp.dot(x_ref[...], w_ref[...], preferred_element_type=jnp.float32)
    o_ref[...] = (acc + b_ref[...].astype(jnp.float32)).astype(o_ref.dtype)
    # TODO(synk): if norm_layer=nn.LayerNorm were requested, fuse mean/var +
    # scale/shift here on the (tm, E) tile instead of Identity.


def patch_embed_pallas(x, weight, bias, *, patch_size=4, tm=2048):
    """PatchEmbed forward.

    x      : (B, C_in, H, W)            NCHW image
    weight : (embed_dim, C_in, ph, pw)  torch Conv2d weight layout
    bias   : (embed_dim,)
    returns (out, Hp, Wp) with out shape (B, Hp*Wp, embed_dim)
    """
    B, C, H, W = x.shape
    ph = pw = patch_size
    E = weight.shape[0]

    # --- right/bottom zero-pad, matching F.pad in the reference module ---
    pad_h = (-H) % ph
    pad_w = (-W) % pw
    if pad_h or pad_w:
        x = jnp.pad(x, ((0, 0), (0, 0), (0, pad_h), (0, pad_w)))
    Hp = (H + pad_h) // ph
    Wp = (W + pad_w) // pw

    # --- patchify to (M, K); flatten order (C, ph, pw) matches Conv2d weight ---
    # Single XLA rearrangement; allow_input_fusion below lets XLA fuse it into
    # the pallas input DMA instead of materializing (M, K) in HBM.
    K = C * ph * pw
    M = B * Hp * Wp
    xp = x.reshape(B, C, Hp, ph, Wp, pw).transpose(0, 2, 4, 1, 3, 5).reshape(M, K)

    # --- weight (E,C,ph,pw) -> (K, E), bias -> (1, E); E is the full last dim
    # of the output array so no lane padding / post-kernel slice is needed.
    w2d = weight.reshape(E, K).T
    b2d = bias.reshape(1, E)

    # --- row tile: big to amortize ~0.35us/step overhead, clamped for small M;
    # multiple of 16 covers both f32 (8) and bf16 (16) sublane tiling.  The
    # grid uses cdiv; the last partial block is masked by Pallas.
    tm_eff = min(_round_up(tm, 16), _round_up(M, 16))
    grid = (pl.cdiv(M, tm_eff),)

    x_item = jnp.dtype(x.dtype).itemsize
    w_item = jnp.dtype(weight.dtype).itemsize
    o_item = x_item
    # double-buffered x/out tiles + (also double-buffered) resident weight/bias
    vmem_bytes = (2 * tm_eff * K * x_item
                  + 2 * tm_eff * E * o_item
                  + 2 * (K * E + E) * w_item)
    vmem_limit = min(max(int(vmem_bytes * 3 // 2) + (1 << 20), 4 << 20), 32 << 20)

    cost = pl.CostEstimate(
        flops=2 * M * K * E,
        transcendentals=0,
        bytes_accessed=M * K * x_item + (K * E + E) * w_item + M * E * o_item,
    )

    out2d = pl.pallas_call(
        _patch_embed_kernel,
        out_shape=jax.ShapeDtypeStruct((M, E), x.dtype),
        grid_spec=pltpu.PrefetchScalarGridSpec(
            num_scalar_prefetch=0,
            grid=grid,
            in_specs=[
                pl.BlockSpec((tm_eff, K), lambda i: (i, 0)),   # patch rows, tiled
                pl.BlockSpec((K, E), lambda i: (0, 0)),        # weight, resident
                pl.BlockSpec((1, E), lambda i: (0, 0)),        # bias, resident
            ],
            out_specs=pl.BlockSpec((tm_eff, E), lambda i: (i, 0)),
        ),
        compiler_params=pltpu.CompilerParams(
            # TODO(synk): on v7x, verify via the Mosaic dump that the single
            # "parallel" M axis is actually sharded across both TensorCores.
            dimension_semantics=("parallel",),
            vmem_limit_bytes=vmem_limit,
            allow_input_fusion=[True, False, False],
        ),
        cost_estimate=cost,
    )(xp, w2d, b2d)

    out = out2d.reshape(B, Hp * Wp, E)   # pure reshape, no extra HBM pass
    return out, Hp, Wp


def patch_embed_reference(x, weight, bias, *, patch_size=4):
    """Pure-JAX reference that mirrors the PyTorch module exactly."""
    ph = pw = patch_size
    B, C, H, W = x.shape
    pad_h = (-H) % ph
    pad_w = (-W) % pw
    if pad_h or pad_w:
        x = jnp.pad(x, ((0, 0), (0, 0), (0, pad_h), (0, pad_w)))
    y = lax.conv_general_dilated(
        x, weight, window_strides=(ph, pw), padding="VALID",
        dimension_numbers=("NCHW", "OIHW", "NCHW"))
    y = y + bias.reshape(1, -1, 1, 1)
    _, E, Hp, Wp = y.shape
    y = y.reshape(B, E, Hp * Wp).transpose(0, 2, 1)   # flatten(2).transpose(1,2)
    return y, Hp, Wp


if __name__ == "__main__":
    key = jax.random.PRNGKey(0)
    B, C_in, H, W = 2, 4, 16, 16
    patch_size = 4
    embed_dim = 96

    k_x, k_w, k_b, k_x2 = jax.random.split(key, 4)
    x = jax.random.normal(k_x, (B, C_in, H, W), dtype=jnp.float32)
    weight = jax.random.normal(
        k_w, (embed_dim, C_in, patch_size, patch_size), jnp.float32) * 0.05
    bias = jax.random.normal(k_b, (embed_dim,), jnp.float32) * 0.05

    # 1) divisible spatial size (no padding branch), f32
    out, Hp, Wp = patch_embed_pallas(x, weight, bias, patch_size=patch_size)
    out = jax.block_until_ready(out)
    ref, Hr, Wr = patch_embed_reference(x, weight, bias, patch_size=patch_size)
    assert out.shape == (B, Hp * Wp, embed_dim)
    assert (Hp, Wp) == (Hr, Wr)
    assert jnp.allclose(out, ref, atol=1e-4, rtol=1e-4), "mismatch vs reference"

    # 2) non-divisible spatial size: exercises the right/bottom zero-pad path
    #    AND the masked partial-block path (M=50 rows, tm_eff=64).
    x2 = jax.random.normal(k_x2, (B, C_in, 18, 18), dtype=jnp.float32)
    out2, Hp2, Wp2 = patch_embed_pallas(x2, weight, bias, patch_size=patch_size)
    out2 = jax.block_until_ready(out2)
    ref2, Hr2, Wr2 = patch_embed_reference(x2, weight, bias, patch_size=patch_size)
    assert out2.shape == (B, Hp2 * Wp2, embed_dim)
    assert (Hp2, Wp2) == (Hr2, Wr2)
    assert jnp.allclose(out2, ref2, atol=1e-4, rtol=1e-4), "mismatch (padded case)"

    # 3) bf16 operands/output (halves HBM traffic; f32 accumulation on MXU)
    xb = x.astype(jnp.bfloat16)
    wb = weight.astype(jnp.bfloat16)
    bb = bias.astype(jnp.bfloat16)
    out3, Hp3, Wp3 = patch_embed_pallas(xb, wb, bb, patch_size=patch_size)
    out3 = jax.block_until_ready(out3)
    ref3, _, _ = patch_embed_reference(
        xb.astype(jnp.float32), wb.astype(jnp.float32), bb.astype(jnp.float32),
        patch_size=patch_size)
    assert out3.dtype == jnp.bfloat16
    assert jnp.allclose(out3.astype(jnp.float32), ref3, atol=2e-2, rtol=2e-2), \
        "mismatch (bf16 case)"

    print("KERNEL_OK")
</pallas_src>

<mosaic_0001>
module attributes {stable_mosaic.version = 11 : i64} {
  func.func @_patch_embed_kernel(%arg0: i32, %arg1: memref<32x64xf32, #tpu.memory_space<vmem>>, %arg2: memref<64x96xf32, #tpu.memory_space<vmem>>, %arg3: memref<1x96xf32, #tpu.memory_space<vmem>>, %arg4: memref<32x96xf32, #tpu.memory_space<vmem>>) attributes {dimension_semantics = [#tpu.dimension_semantics<parallel>], iteration_bounds = array<i64: 1>, scalar_prefetch = 0 : i64, scratch_operands = 0 : i64, tpu.core_type = #tpu.core_type<tc>, window_params = [{transform_indices = @transform_0, window_bounds = array<i64: 32, 64>}, {pipeline_mode = #tpu.pipeline_mode<synchronous>, transform_indices = @transform_1, window_bounds = array<i64: 64, 96>}, {pipeline_mode = #tpu.pipeline_mode<synchronous>, transform_indices = @transform_2, window_bounds = array<i64: 1, 96>}, {transform_indices = @transform_3, window_bounds = array<i64: 32, 96>}]} {
    %c0 = arith.constant 0 : index
    %c0_0 = arith.constant 0 : index
    %0 = vector.load %arg1[%c0, %c0_0] : memref<32x64xf32, #tpu.memory_space<vmem>>, vector<32x64xf32>
    %c0_1 = arith.constant 0 : index
    %c0_2 = arith.constant 0 : index
    %1 = vector.load %arg2[%c0_1, %c0_2] : memref<64x96xf32, #tpu.memory_space<vmem>>, vector<64x96xf32>
    %cst = arith.constant dense<0.000000e+00> : vector<32x96xf32>
    %2 = tpu.matmul %0, %1, %cst {dimension_numbers = #tpu.dot_dimension_numbers<[1], [0], [0], [1], [0, 0, 1, 1], [], []>} : vector<32x64xf32>, vector<64x96xf32>, vector<32x96xf32> -> vector<32x96xf32>
    %c0_3 = arith.constant 0 : index
    %c0_4 = arith.constant 0 : index
    %3 = vector.load %arg3[%c0_3, %c0_4] : memref<1x96xf32, #tpu.memory_space<vmem>>, vector<1x96xf32>
    %4 = vector.broadcast %3 : vector<1x96xf32> to vector<32x96xf32>
    %5 = arith.addf %2, %4 : vector<32x96xf32>
    %c0_5 = arith.constant 0 : index
    %c0_6 = arith.constant 0 : index
    %6 = vector.load %arg4[%c0_5, %c0_6] : memref<32x96xf32, #tpu.memory_space<vmem>>, vector<32x96xf32>
    tpu.vector_store %arg4[%c0_5, %c0_6], %5 {strides = array<i32>} : memref<32x96xf32, #tpu.memory_space<vmem>>, vector<32x96xf32>,
    return
  }
  func.func @transform_0(%arg0: i32) -> (i32, i32) {
    %c0_i32 = arith.constant 0 : i32
    %c0_i32_0 = arith.constant 0 : i32
    return %arg0, %c0_i32 : i32, i32
  }
  func.func @transform_1(%arg0: i32) -> (i32, i32) {
    %c0_i32 = arith.constant 0 : i32
    %c0_i32_0 = arith.constant 0 : i32
    %c0_i32_1 = arith.constant 0 : i32
    return %c0_i32, %c0_i32_0 : i32, i32
  }
  func.func @transform_2(%arg0: i32) -> (i32, i32) {
    %c0_i32 = arith.constant 0 : i32
    %c0_i32_0 = arith.constant 0 : i32
    %c0_i32_1 = arith.constant 0 : i32
    return %c0_i32, %c0_i32_0 : i32, i32
  }
  func.func @transform_3(%arg0: i32) -> (i32, i32) {
    %c0_i32 = arith.constant 0 : i32
    %c0_i32_0 = arith.constant 0 : i32
    return %arg0, %c0_i32 : i32, i32
  }
}

</mosaic_0001>

<llo_original>
// kernel: tpu_custom_call.1
$region0: #{tpu_custom_call.1}
  #allocation0 [shape = 'u32[]', space=smem, size = 0x4, offset = 0x4, fixed_abs, tag = 'smem constant byte address 0x4 - core index']
  #allocation1 [shape = 'u32[144,128]{1,0:T(1,128)}', space=vmem, size = 0x12000, scoped, tag = 'internal scratch']
  %s0 = inlined_call_operand.hbm [shape: f32[32,64], index: 0, kind: input, shape index: {}]
  %s1 = inlined_call_operand.hbm [shape: f32[64,96], index: 1, kind: input, shape index: {}]
  %s2 = inlined_call_operand.vmem [shape: f32[1,96], index: 2, kind: input, shape index: {}]
  %s3 = inlined_call_operand.hbm [shape: f32[32,96], index: 3, kind: output, shape index: {}]
  %s4 = sld [smem:[#allocation0]]
  $region30: #{tpu_custom_call.1} parent=0
    _
  %s6 = ssub.s32 1, %s4
  %s7 = scalar_select 0, %s6, %s4
  $region1: #{tpu_custom_call.1} parent=0
    #allocation2 [shape = 'u8[16384]{0}', space=vmem, size = 0x4000, scoped, tag = 'input window, operand 0, single buffered']
    #allocation3 [shape = 's32[1]{0}', space=sflag, size = 0x4, scoped, tag = 'scoped memory for tpu_custom_call.1']
    #allocation4 [shape = 's32[1]{0}', space=sflag, size = 0x4, scoped, tag = 'scoped memory for tpu_custom_call.1']
    #allocation5 [shape = 'u8[32768]{0}', space=vmem, size = 0x8000, scoped, tag = 'input window, operand 1, single buffered']
    #allocation6 [shape = 's32[1]{0}', space=sflag, size = 0x4, scoped, tag = 'scoped memory for tpu_custom_call.1']
    #allocation7 [shape = 'u8[16384]{0}', space=vmem, size = 0x4000, scoped, tag = 'output window, operand 0, single buffered']
    %8 = vsyncpa [#allocation3], 0
    %9 = vsyncpa [#allocation6], 0
    %10 = vsyncpa [#allocation4], 0
    // Predicated region
    $region2: #{tpu_custom_call.1} parent=1 // pred_check
      _
    $region3: #{tpu_custom_call.1} parent=1 // pred_check_branch
      %12 = sbr.rel (0) target = $region5
    $region4: #{tpu_custom_call.1} parent=1 // pred_region
      %s14 = ssub.s32 512, 512
      %15 = vsyncadd [#allocation3], %s14
      %s16 = sshll.u32 [#allocation2], 4
      %s17 = int_to_ptr.vmem [resolvable:$true] %s16
      %22 = dma.hbm_to_vmem [thread:$0]  %s0, 512, %s17, [#allocation3], 128, 128, 8
    $region5: #{tpu_custom_call.1} parent=1 // pred_fallthru
      _
    // Predicated region
    $region6: #{tpu_custom_call.1} parent=1 // pred_check
      _
    $region7: #{tpu_custom_call.1} parent=1 // pred_check_branch
      %24 = sbr.rel (0) target = $region9
    $region8: #{tpu_custom_call.1} parent=1 // pred_region
      %s26 = ssub.s32 1024, 1024
      %27 = vsyncadd [#allocation6], %s26
      %s28 = sshll.u32 [#allocation5], 4
      %s29 = int_to_ptr.vmem [resolvable:$true] %s28
      %34 = dma.hbm_to_vmem [thread:$0]  %s1, 1024, %s29, [#allocation6], 128, 128, 8
    $region9: #{tpu_custom_call.1} parent=1 // pred_fallthru
      _
    // Predicated region
    $region10: #{tpu_custom_call.1} parent=1 // pred_check
      _
    $region11: #{tpu_custom_call.1} parent=1 // pred_check_branch
      %36 = sbr.rel (0) target = $region13
    $region12: #{tpu_custom_call.1} parent=1 // pred_region
      _
    $region13: #{tpu_custom_call.1} parent=1 // pred_fallthru
      _
    // Predicated region
    $region14: #{tpu_custom_call.1} parent=1 // pred_check
      _
    $region15: #{tpu_custom_call.1} parent=1 // pred_check_branch
      %38 = sbr.rel (0) target = $region17
    $region16: #{tpu_custom_call.1} parent=1 // pred_region
      %39 = dma.done [#allocation3], 512
    $region17: #{tpu_custom_call.1} parent=1 // pred_fallthru
      _
    // Predicated region
    $region18: #{tpu_custom_call.1} parent=1 // pred_check
      _
    $region19: #{tpu_custom_call.1} parent=1 // pred_check_branch
      %41 = sbr.rel (0) target = $region21
    $region20: #{tpu_custom_call.1} parent=1 // pred_region
      %42 = dma.done [#allocation6], 1024
    $region21: #{tpu_custom_call.1} parent=1 // pred_fallthru
      _
    %v43 = vld [vmem:[#allocation2] sm:$0xff]
    %v44 = vld [vmem:[#allocation2 + $0x8] sm:$0xff]
    %v45 = vld [vmem:[#allocation2 + $0x10] sm:$0xff]
    %v46 = vld [vmem:[#allocation2 + $0x18] sm:$0xff]
    %v47 = vld [vmem:[#allocation5] sm:$0xff]
    %v48 = vld [vmem:[#allocation5 + $0x8] sm:$0xff]
    %v49 = vld [vmem:[#allocation5 + $0x10] sm:$0xff]
    %v50 = vld [vmem:[#allocation5 + $0x18] sm:$0xff]
    %v51 = vld [vmem:[#allocation5 + $0x20] sm:$0xff]
    %v52 = vld [vmem:[#allocation5 + $0x28] sm:$0xff]
    %v53 = vld [vmem:[#allocation5 + $0x30] sm:$0xff]
    %v54 = vld [vmem:[#allocation5 + $0x38] sm:$0xff]
    %v55 = vld [vmem:[%s2] sm:$0x1]
    %v57 = vlaneseq
    %v58 = vshrl.u32 %v57, 7
    %v59 = vsub.s32 0, %v58
    %v60 = vrot.slane %v55, %v59
    %vm62 = vcmask 523264
    %v64 = vsel %vm62, %v43, 0
    %v67 = vsel %vm62, %v44, 0
    %v70 = vsel %vm62, %v45, 0
    %v73 = vsel %vm62, %v46, 0
    %75 = vmatprep.subr.mxu0 0.0
    %76 = vmatpush1.msra.mxu0 %v47
    %77 = vmatprep.subr.mxu0 0.0
    %78 = vmatpush1.msra.mxu0 %v48
    %79 = vmatprep.subr.mxu0 0.0
    %80 = vmatpush1.msra.mxu0 %v49
    %81 = vmatprep.subr.mxu0 0.0
    %82 = vmatpush1.msra.mxu0 %v50
    %83 = vmatprep.subr.mxu0 0.0
    %84 = vmatpush1.msra.mxu0 %v51
    %85 = vmatprep.subr.mxu0 0.0
    %86 = vmatpush1.msra.mxu0 %v52
    %87 = vmatprep.subr.mxu0 0.0
    %88 = vmatpush1.msra.mxu0 %v53
    %89 = vmatprep.subr.mxu0 0.0
    %90 = vmatpush1.msra.mxu0 %v54
    %91 = vmatprep.subr.mxu0 0.0
    %92 = vmatpush1.msra.mxu0 0.0
    %93 = vmatprep.subr.mxu0 0.0
    %94 = vmatpush1.msra.mxu0 0.0
    %95 = vmatprep.subr.mxu0 0.0
    %96 = vmatpush1.msra.mxu0 0.0
    %97 = vmatprep.subr.mxu0 0.0
    %98 = vmatpush1.msra.mxu0 0.0
    %99 = vmatprep.subr.mxu0 0.0
    %100 = vmatpush1.msra.mxu0 0.0
    %101 = vmatprep.subr.mxu0 0.0
    %102 = vmatpush1.msra.mxu0 0.0
    %103 = vmatprep.subr.mxu0 0.0
    %104 = vmatpush1.msra.mxu0 0.0
    %105 = vmatprep.subr.mxu0 0.0
    %106 = vmatpush1.msra.mxu0 0.0
    %107 = vmatprep.subr.mxu0 0.0
    %108 = vmatpush1.msra.mxu0 0.0
    %109 = vmatprep.subr.mxu0 0.0
    %110 = vmatpush1.msra.mxu0 0.0
    %111 = vmatprep.subr.mxu0 0.0
    %112 = vmatpush1.msra.mxu0 0.0
    %113 = vmatprep.subr.mxu0 0.0
    %114 = vmatpush1.msra.mxu0 0.0
    %115 = vmatprep.subr.mxu0 0.0
    %116 = vmatpush1.msra.mxu0 0.0
    %117 = vmatprep.subr.mxu0 0.0
    %118 = vmatpush1.msra.mxu0 0.0
    %119 = vmatprep.subr.mxu0 0.0
    %120 = vmatpush1.msra.mxu0 0.0
    %121 = vmatprep.subr.mxu0 0.0
    %122 = vmatpush1.msra.mxu0 0.0
    %123 = vmatprep.subr.mxu0 0.0
    %124 = vmatpush1.msra.mxu0 0.0
    %125 = vmatprep.subr.mxu0 0.0
    %126 = vmatpush1.msra.mxu0 0.0
    %127 = vmatprep.subr.mxu0 0.0
    %128 = vmatpush1.msra.mxu0 0.0
    %129 = vmatprep.subr.mxu0 0.0
    %130 = vmatpush1.msra.mxu0 0.0
    %131 = vmatprep.subr.mxu0 0.0
    %132 = vmatpush1.msra.mxu0 0.0
    %133 = vmatprep.subr.mxu0 0.0
    %134 = vmatpush1.msra.mxu0 0.0
    %135 = vmatprep.subr.mxu0 0.0
    %136 = vmatpush1.msra.mxu0 0.0
    %137 = vmatprep.subr.mxu0 0.0
    %138 = vmatpush1.msra.mxu0 0.0
    %139 = vmatprep.mubr.f32.mxu0 0.0
    %140 = vmatmul.mubr.f32.gmra.mrb[0].mxu0 %v64
    %v141 = vpop.f32.mrb[0].mxu0
    %v142 = vadd.f32 %v60, %v141
    %v143 = vpop.f32.mrb[0].mxu0
    %144 = vmatprep.mubr.f32.mxu0 0.0
    %145 = vmatmul.mubr.f32.gmra.mrb[0].mxu0 %v67
    %v146 = vpop.f32.mrb[0].mxu0
    %v147 = vadd.f32 %v60, %v146
    %v148 = vpop.f32.mrb[0].mxu0
    %149 = vmatprep.mubr.f32.mxu0 0.0
    %150 = vmatmul.mubr.f32.gmra.mrb[0].mxu0 %v70
    %v151 = vpop.f32.mrb[0].mxu0
    %v152 = vadd.f32 %v60, %v151
    %v153 = vpop.f32.mrb[0].mxu0
    %154 = vmatprep.mubr.f32.mxu0 0.0
    %155 = vmatmul.mubr.f32.gmra.mrb[0].mxu0 %v73
    %v156 = vpop.f32.mrb[0].mxu0
    %v157 = vadd.f32 %v60, %v156
    %v158 = vpop.f32.mrb[0].mxu0
    %159 = vdwg.mxu0
    %vm160 = vcmask 785408
    %161 = vst.msk [vmem:[#allocation7] sm:$0xff] %vm160, %v142
    %162 = vst.msk [vmem:[#allocation7 + $0x8] sm:$0xff] %vm160, %v147
    %163 = vst.msk [vmem:[#allocation7 + $0x10] sm:$0xff] %vm160, %v152
    %164 = vst.msk [vmem:[#allocation7 + $0x18] sm:$0xff] %vm160, %v157
    // Predicated region
    $region22: #{tpu_custom_call.1} parent=1 // pred_check
      _
    $region23: #{tpu_custom_call.1} parent=1 // pred_check_branch
      %166 = sbr.rel (0) target = $region25
    $region24: #{tpu_custom_call.1} parent=1 // pred_region
      %s168 = ssub.s32 512, 512
      %169 = vsyncadd [#allocation4], %s168
      %s170 = sshll.u32 [#allocation7], 4
      %s171 = int_to_ptr.vmem [resolvable:$true] %s170
      %176 = dma.vmem_to_hbm [thread:$0]  %s171, 512, %s3, [#allocation4], 128, 128, 8
    $region25: #{tpu_custom_call.1} parent=1 // pred_fallthru
      _
    // Predicated region
    $region26: #{tpu_custom_call.1} parent=1 // pred_check
      _
    $region27: #{tpu_custom_call.1} parent=1 // pred_check_branch
      %178 = sbr.rel (0) target = $region29
    $region28: #{tpu_custom_call.1} parent=1 // pred_region
      %179 = dma.done [#allocation4], 512
    $region29: #{tpu_custom_call.1} parent=1 // pred_fallthru
      _
    %180 = vsyncpa [#allocation3], 1
    %181 = vsyncpa [#allocation6], 1
    %182 = vsyncpa [#allocation4], 1

</llo_original>
